<compile_context>
chip_gen: v7x
topology: tpu7x:2x2x1
jax: 0.10.0
libtpu: 0.0.40
codegen_flags: <defaults>
</compile_context>

<pallas_src>
import functools

import jax
import jax.numpy as jnp
from jax import lax
from jax.experimental import pallas as pl
from jax.experimental.pallas import tpu as pltpu


_LANES = 128            # lane width / padded adv|val and output width
_SPLIT_MIN_ROWS = 512   # above this batch, force >=2 grid steps (v7x: 2 TensorCores)


def _round_up(x, m):
    return ((x + m - 1) // m) * m


def dueling_q_kernel(x_ref, w12_ref, b12_ref, wav_ref, bav_ref,
                     wo_ref, bo_ref, out_ref):
    cdt = w12_ref.dtype                      # MXU input dtype (f32 or bf16)

    x = x_ref[...].astype(cdt)

    # h = relu([fc1 | fc2](state))  -> (TILE, 2*fc1_units) in one matmul
    h = jnp.dot(x, w12_ref[...], preferred_element_type=jnp.float32)
    h = jnp.maximum(h + b12_ref[...], 0.0)

    # av = relu(h @ blockdiag(Wa, Wv) + [ba | bv | 0...])  -> (TILE, 128)
    # cols 0..A-1 = advantages, col A = state value, cols A+1.. stay exactly 0.
    av = jnp.dot(h.astype(cdt), wav_ref[...], preferred_element_type=jnp.float32)
    av = jnp.maximum(av + bav_ref[...], 0.0)

    # Lane-dense out_layer: padded weight rows/cols are zero, padded bias cols
    # are -1e30 so the padded logits contribute exp(...) == 0 to the softmax.
    logits = jnp.dot(av.astype(cdt), wo_ref[...], preferred_element_type=jnp.float32)
    logits = logits + bo_ref[...]

    # softmax over the action axis (exact divide for parity with jax.nn.softmax)
    m = jnp.max(logits, axis=-1, keepdims=True)
    e = jnp.exp(logits - m)
    out_ref[...] = (e / jnp.sum(e, axis=-1, keepdims=True)).astype(out_ref.dtype)


@functools.partial(jax.jit, static_argnames=("action_size", "tile_b"))
def dueling_q_forward(state, fused, *, action_size, tile_b=2048):
    """state: (B, state_size) f32.  fused: dict from pack_fused_params."""
    B, S = state.shape
    H2 = fused["w12"].shape[1]      # 2 * fc1_units
    NP = fused["wav"].shape[1]      # padded adv|val width (128)
    NO = fused["wo"].shape[1]       # padded (lane-dense) output width (128)

    # ---- batch tiling: minimal padding; >=2 steps for v7x when worthwhile ----
    bp_min = _round_up(B, 8)
    tile_cap = max(8, _round_up(min(tile_b, bp_min), 8))
    n_steps = pl.cdiv(bp_min, tile_cap)
    if n_steps == 1 and bp_min >= _SPLIT_MIN_ROWS:
        n_steps = 2                 # give both v7x TensorCores work
    tile = _round_up(pl.cdiv(bp_min, n_steps), 8)
    Bp = tile * n_steps
    if Bp != B:
        state = jnp.pad(state, ((0, Bp - B), (0, 0)))

    def weight_spec(shape):
        # full-array block, constant index -> weight stays resident in VMEM
        return pl.BlockSpec(shape, lambda i: (0, 0))

    in_specs = [
        pl.BlockSpec((tile, S), lambda i: (i, 0)),     # state tile (pipelined)
        weight_spec((S, H2)),                          # w12
        weight_spec((1, H2)),                          # b12
        weight_spec((H2, NP)),                         # wav (block-diag, padded)
        weight_spec((1, NP)),                          # bav
        weight_spec((NP, NO)),                         # wo  (lane-dense, padded)
        weight_spec((1, NO)),                          # bo  (-1e30 in padded cols)
    ]
    out_spec = pl.BlockSpec((tile, NO), lambda i: (i, 0))

    flops = 2 * Bp * (S * H2 + H2 * NP + NP * NO)
    w_bytes = sum(int(v.size) * v.dtype.itemsize for v in fused.values())
    bytes_accessed = 4 * Bp * (S + NO) + w_bytes
    transcendentals = Bp * NO        # one exp per (padded) logit

    out = pl.pallas_call(
        dueling_q_kernel,
        out_shape=jax.ShapeDtypeStruct((Bp, NO), jnp.float32),
        grid=(n_steps,),
        in_specs=in_specs,
        out_specs=out_spec,
        compiler_params=pltpu.CompilerParams(
            dimension_semantics=("parallel",)),
        cost_estimate=pl.CostEstimate(
            flops=flops,
            transcendentals=transcendentals,
            bytes_accessed=bytes_accessed),
    )(state, fused["w12"], fused["b12"], fused["wav"], fused["bav"],
      fused["wo"], fused["bo"])

    return out[:B, :action_size]


def init_params(key, state_size, action_size, fc1_units=64):
    """PyTorch nn.Linear default init (U(-1/sqrt(fan_in), +)), stored transposed."""
    def linear(k, fan_in, fan_out):
        kw, kb = jax.random.split(k)
        bound = 1.0 / jnp.sqrt(jnp.float32(fan_in))
        w = jax.random.uniform(kw, (fan_in, fan_out), jnp.float32, -bound, bound)
        b = jax.random.uniform(kb, (1, fan_out), jnp.float32, -bound, bound)
        return w, b

    k1, k2, k3, k4, k5 = jax.random.split(key, 5)
    w1, b1 = linear(k1, state_size, fc1_units)          # fc1
    w2, b2 = linear(k2, state_size, fc1_units)          # fc2
    wa, ba = linear(k3, fc1_units, action_size)         # action_advantages
    wv, bv = linear(k4, fc1_units, 1)                   # state_value
    wo, bo = linear(k5, action_size + 1, action_size)   # out_layer
    return dict(w1=w1, b1=b1, w2=w2, b2=b2, wa=wa, ba=ba,
                wv=wv, bv=bv, wo=wo, bo=bo)


def pack_fused_params(p, pad_n=_LANES, compute_dtype=jnp.float32):
    """Build the fused / zero-padded weights the kernel consumes (host-side, once).

    compute_dtype is the dtype of the weight *matrices* fed to the MXU
    (f32 for strict parity, bf16 for the fast path). Biases stay f32 and are
    added to the f32 accumulator.
    """
    S, F = p["w1"].shape
    A = p["wa"].shape[1]
    assert A + 1 <= pad_n

    # fc1 | fc2 fused along the output axis
    w12 = jnp.concatenate([p["w1"], p["w2"]], axis=1)             # (S, 2F)
    b12 = jnp.concatenate([p["b1"], p["b2"]], axis=1)             # (1, 2F)

    # block-diagonal adv/val weight, N zero-padded to pad_n lanes
    wav = jnp.zeros((2 * F, pad_n), jnp.float32)
    wav = wav.at[:F, :A].set(p["wa"])
    wav = wav.at[F:, A:A + 1].set(p["wv"])
    bav = jnp.zeros((1, pad_n), jnp.float32)
    bav = bav.at[:, :A].set(p["ba"])
    bav = bav.at[:, A:A + 1].set(p["bv"])

    # lane-dense out_layer: rows beyond A+1 and cols beyond A are zero; the
    # padded logit columns get a -1e30 bias so they vanish in the softmax.
    wo = jnp.zeros((pad_n, pad_n), jnp.float32)
    wo = wo.at[:A + 1, :A].set(p["wo"])
    bo = jnp.full((1, pad_n), -1e30, jnp.float32)
    bo = bo.at[:, :A].set(p["bo"])

    return dict(w12=w12.astype(compute_dtype), b12=b12,
                wav=wav.astype(compute_dtype), bav=bav,
                wo=wo.astype(compute_dtype), bo=bo)


def reference_forward(state, p):
    """Pure-JAX reference matching the PyTorch module (true f32 matmuls)."""
    hp = lax.Precision.HIGHEST
    h1 = jnp.maximum(jnp.dot(state, p["w1"], precision=hp) + p["b1"], 0.0)
    h2 = jnp.maximum(jnp.dot(state, p["w2"], precision=hp) + p["b2"], 0.0)
    adv = jnp.maximum(jnp.dot(h1, p["wa"], precision=hp) + p["ba"], 0.0)
    val = jnp.maximum(jnp.dot(h2, p["wv"], precision=hp) + p["bv"], 0.0)
    x = jnp.concatenate([adv, val], axis=1)
    logits = jnp.dot(x, p["wo"], precision=hp) + p["bo"]
    return jax.nn.softmax(logits, axis=-1)   # F.softmax default dim=1 for 2-D input


if __name__ == "__main__":
    state_size = 16
    action_size = 4
    fc1_units = 64

    key = jax.random.PRNGKey(0)
    k_params, k_s1, k_s2, k_s3 = jax.random.split(key, 4)

    params = init_params(k_params, state_size, action_size, fc1_units)
    fused_f32 = pack_fused_params(params)                      # strict-parity weights

    # Case 1: tiny batch, single grid step.
    state1 = jax.random.normal(k_s1, (8, state_size), dtype=jnp.float32)
    out1 = dueling_q_forward(state1, fused_f32, action_size=action_size)
    jax.block_until_ready(out1)
    ref1 = reference_forward(state1, params)
    assert out1.shape == (8, action_size)
    assert jnp.allclose(out1, ref1, atol=2e-3, rtol=2e-3), \
        float(jnp.max(jnp.abs(out1 - ref1)))
    assert jnp.allclose(jnp.sum(out1, axis=-1), 1.0, atol=1e-3)

    # Case 2: non-multiple batch -> multi-step grid with minimal (8-row-aligned) padding.
    state2 = jax.random.normal(k_s2, (300, state_size), dtype=jnp.float32)
    out2 = dueling_q_forward(state2, fused_f32, action_size=action_size, tile_b=128)
    jax.block_until_ready(out2)
    ref2 = reference_forward(state2, params)
    assert out2.shape == (300, action_size)
    assert jnp.allclose(out2, ref2, atol=2e-3, rtol=2e-3), \
        float(jnp.max(jnp.abs(out2 - ref2)))

    # Case 3: bf16 fast path; batch large enough to trigger the >=2-step (v7x) split.
    fused_bf16 = pack_fused_params(params, compute_dtype=jnp.bfloat16)
    state3 = jax.random.normal(k_s3, (520, state_size), dtype=jnp.float32)
    out3 = dueling_q_forward(state3, fused_bf16, action_size=action_size)
    jax.block_until_ready(out3)
    ref3 = reference_forward(state3, params)
    assert out3.shape == (520, action_size)
    # bf16 MXU inputs (f32 accumulation): looser tolerance vs the f32 reference.
    assert jnp.allclose(out3, ref3, atol=1e-2, rtol=0.0), \
        float(jnp.max(jnp.abs(out3 - ref3)))
    assert jnp.allclose(jnp.sum(out3, axis=-1), 1.0, atol=1e-3)

    print("KERNEL_OK")
</pallas_src>

<mosaic_0001>
module attributes {stable_mosaic.version = 11 : i64} {
  func.func @dueling_q_kernel(%arg0: i32, %arg1: memref<8x16xf32, #tpu.memory_space<vmem>>, %arg2: memref<16x128xf32, #tpu.memory_space<vmem>>, %arg3: memref<1x128xf32, #tpu.memory_space<vmem>>, %arg4: memref<128x128xf32, #tpu.memory_space<vmem>>, %arg5: memref<1x128xf32, #tpu.memory_space<vmem>>, %arg6: memref<128x128xf32, #tpu.memory_space<vmem>>, %arg7: memref<1x128xf32, #tpu.memory_space<vmem>>, %arg8: memref<8x128xf32, #tpu.memory_space<vmem>>) attributes {dimension_semantics = [#tpu.dimension_semantics<parallel>], iteration_bounds = array<i64: 1>, scalar_prefetch = 0 : i64, scratch_operands = 0 : i64, tpu.core_type = #tpu.core_type<tc>, window_params = [{transform_indices = @transform_0, window_bounds = array<i64: 8, 16>}, {pipeline_mode = #tpu.pipeline_mode<synchronous>, transform_indices = @transform_1, window_bounds = array<i64: 16, 128>}, {pipeline_mode = #tpu.pipeline_mode<synchronous>, transform_indices = @transform_2, window_bounds = array<i64: 1, 128>}, {pipeline_mode = #tpu.pipeline_mode<synchronous>, transform_indices = @transform_3, window_bounds = array<i64: 128, 128>}, {pipeline_mode = #tpu.pipeline_mode<synchronous>, transform_indices = @transform_4, window_bounds = array<i64: 1, 128>}, {pipeline_mode = #tpu.pipeline_mode<synchronous>, transform_indices = @transform_5, window_bounds = array<i64: 128, 128>}, {pipeline_mode = #tpu.pipeline_mode<synchronous>, transform_indices = @transform_6, window_bounds = array<i64: 1, 128>}, {transform_indices = @transform_7, window_bounds = array<i64: 8, 128>}]} {
    %c0 = arith.constant 0 : index
    %c0_0 = arith.constant 0 : index
    %0 = vector.load %arg1[%c0, %c0_0] : memref<8x16xf32, #tpu.memory_space<vmem>>, vector<8x16xf32>
    %c0_1 = arith.constant 0 : index
    %c0_2 = arith.constant 0 : index
    %1 = vector.load %arg2[%c0_1, %c0_2] : memref<16x128xf32, #tpu.memory_space<vmem>>, vector<16x128xf32>
    %cst = arith.constant dense<0.000000e+00> : vector<8x128xf32>
    %2 = tpu.matmul %0, %1, %cst {dimension_numbers = #tpu.dot_dimension_numbers<[1], [0], [0], [1], [0, 0, 1, 1], [], []>} : vector<8x16xf32>, vector<16x128xf32>, vector<8x128xf32> -> vector<8x128xf32>
    %c0_3 = arith.constant 0 : index
    %c0_4 = arith.constant 0 : index
    %3 = vector.load %arg3[%c0_3, %c0_4] : memref<1x128xf32, #tpu.memory_space<vmem>>, vector<1x128xf32>
    %4 = vector.broadcast %3 : vector<1x128xf32> to vector<8x128xf32>
    %5 = arith.addf %2, %4 : vector<8x128xf32>
    %cst_5 = arith.constant 0.000000e+00 : f32
    %6 = vector.broadcast %cst_5 : f32 to vector<8x128xf32>
    %7 = arith.maximumf %5, %6 : vector<8x128xf32>
    %c0_6 = arith.constant 0 : index
    %c0_7 = arith.constant 0 : index
    %8 = vector.load %arg4[%c0_6, %c0_7] : memref<128x128xf32, #tpu.memory_space<vmem>>, vector<128x128xf32>
    %cst_8 = arith.constant dense<0.000000e+00> : vector<8x128xf32>
    %9 = tpu.matmul %7, %8, %cst_8 {dimension_numbers = #tpu.dot_dimension_numbers<[1], [0], [0], [1], [0, 0, 1, 1], [], []>} : vector<8x128xf32>, vector<128x128xf32>, vector<8x128xf32> -> vector<8x128xf32>
    %c0_9 = arith.constant 0 : index
    %c0_10 = arith.constant 0 : index
    %10 = vector.load %arg5[%c0_9, %c0_10] : memref<1x128xf32, #tpu.memory_space<vmem>>, vector<1x128xf32>
    %11 = vector.broadcast %10 : vector<1x128xf32> to vector<8x128xf32>
    %12 = arith.addf %9, %11 : vector<8x128xf32>
    %cst_11 = arith.constant 0.000000e+00 : f32
    %13 = vector.broadcast %cst_11 : f32 to vector<8x128xf32>
    %14 = arith.maximumf %12, %13 : vector<8x128xf32>
    %c0_12 = arith.constant 0 : index
    %c0_13 = arith.constant 0 : index
    %15 = vector.load %arg6[%c0_12, %c0_13] : memref<128x128xf32, #tpu.memory_space<vmem>>, vector<128x128xf32>
    %cst_14 = arith.constant dense<0.000000e+00> : vector<8x128xf32>
    %16 = tpu.matmul %14, %15, %cst_14 {dimension_numbers = #tpu.dot_dimension_numbers<[1], [0], [0], [1], [0, 0, 1, 1], [], []>} : vector<8x128xf32>, vector<128x128xf32>, vector<8x128xf32> -> vector<8x128xf32>
    %c0_15 = arith.constant 0 : index
    %c0_16 = arith.constant 0 : index
    %17 = vector.load %arg7[%c0_15, %c0_16] : memref<1x128xf32, #tpu.memory_space<vmem>>, vector<1x128xf32>
    %18 = vector.broadcast %17 : vector<1x128xf32> to vector<8x128xf32>
    %19 = arith.addf %16, %18 : vector<8x128xf32>
    %cst_17 = arith.constant dense<0xFF800000> : vector<8xf32>
    %20 = vector.multi_reduction <maximumf>, %19, %cst_17 [1] : vector<8x128xf32> to vector<8xf32>
    %21 = vector.shape_cast %20 : vector<8xf32> to vector<8x1xf32>
    %22 = vector.broadcast %21 : vector<8x1xf32> to vector<8x128xf32>
    %23 = arith.subf %19, %22 : vector<8x128xf32>
    %24 = math.exp %23 : vector<8x128xf32>
    %cst_18 = arith.constant dense<0.000000e+00> : vector<8xf32>
    %25 = vector.multi_reduction <add>, %24, %cst_18 [1] : vector<8x128xf32> to vector<8xf32>
    %26 = vector.shape_cast %25 : vector<8xf32> to vector<8x1xf32>
    %27 = vector.broadcast %26 : vector<8x1xf32> to vector<8x128xf32>
    %28 = arith.divf %24, %27 : vector<8x128xf32>
    %c0_19 = arith.constant 0 : index
    %c0_20 = arith.constant 0 : index
    %29 = vector.load %arg8[%c0_19, %c0_20] : memref<8x128xf32, #tpu.memory_space<vmem>>, vector<8x128xf32>
    tpu.vector_store %arg8[%c0_19, %c0_20], %28 {strides = array<i32>} : memref<8x128xf32, #tpu.memory_space<vmem>>, vector<8x128xf32>,
    return
  }
  func.func @transform_0(%arg0: i32) -> (i32, i32) {
    %c0_i32 = arith.constant 0 : i32
    %c0_i32_0 = arith.constant 0 : i32
    return %arg0, %c0_i32 : i32, i32
  }
  func.func @transform_1(%arg0: i32) -> (i32, i32) {
    %c0_i32 = arith.constant 0 : i32
    %c0_i32_0 = arith.constant 0 : i32
    %c0_i32_1 = arith.constant 0 : i32
    return %c0_i32, %c0_i32_0 : i32, i32
  }
  func.func @transform_2(%arg0: i32) -> (i32, i32) {
    %c0_i32 = arith.constant 0 : i32
    %c0_i32_0 = arith.constant 0 : i32
    %c0_i32_1 = arith.constant 0 : i32
    return %c0_i32, %c0_i32_0 : i32, i32
  }
  func.func @transform_3(%arg0: i32) -> (i32, i32) {
    %c0_i32 = arith.constant 0 : i32
    %c0_i32_0 = arith.constant 0 : i32
    %c0_i32_1 = arith.constant 0 : i32
    return %c0_i32, %c0_i32_0 : i32, i32
  }
  func.func @transform_4(%arg0: i32) -> (i32, i32) {
    %c0_i32 = arith.constant 0 : i32
    %c0_i32_0 = arith.constant 0 : i32
    %c0_i32_1 = arith.constant 0 : i32
    return %c0_i32, %c0_i32_0 : i32, i32
  }
  func.func @transform_5(%arg0: i32) -> (i32, i32) {
    %c0_i32 = arith.constant 0 : i32
    %c0_i32_0 = arith.constant 0 : i32
    %c0_i32_1 = arith.constant 0 : i32
    return %c0_i32, %c0_i32_0 : i32, i32
  }
  func.func @transform_6(%arg0: i32) -> (i32, i32) {
    %c0_i32 = arith.constant 0 : i32
    %c0_i32_0 = arith.constant 0 : i32
    %c0_i32_1 = arith.constant 0 : i32
    return %c0_i32, %c0_i32_0 : i32, i32
  }
  func.func @transform_7(%arg0: i32) -> (i32, i32) {
    %c0_i32 = arith.constant 0 : i32
    %c0_i32_0 = arith.constant 0 : i32
    return %arg0, %c0_i32 : i32, i32
  }
}

</mosaic_0001>

<llo_original>
// kernel: dueling_q_forward.1
$region0: #{dueling_q_forward.1}
  #allocation0 [shape = 'u32[]', space=smem, size = 0x4, offset = 0x4, fixed_abs, tag = 'smem constant byte address 0x4 - core index']
  #allocation1 [shape = 'u32[144,128]{1,0:T(1,128)}', space=vmem, size = 0x12000, scoped, tag = 'internal scratch']
  %s0 = inlined_call_operand.hbm [shape: f32[8,16], index: 0, kind: input, shape index: {}]
  %s1 = inlined_call_operand.hbm [shape: f32[16,128], index: 1, kind: input, shape index: {}]
  %s2 = inlined_call_operand.vmem [shape: f32[1,128], index: 2, kind: input, shape index: {}]
  %s3 = inlined_call_operand.hbm [shape: f32[128,128], index: 3, kind: input, shape index: {}]
  %s4 = inlined_call_operand.vmem [shape: f32[1,128], index: 4, kind: input, shape index: {}]
  %s5 = inlined_call_operand.hbm [shape: f32[128,128], index: 5, kind: input, shape index: {}]
  %s6 = inlined_call_operand.vmem [shape: f32[1,128], index: 6, kind: input, shape index: {}]
  %s7 = inlined_call_operand.vmem [shape: f32[8,128], index: 7, kind: output, shape index: {}]
  %s8 = sld [smem:[#allocation0]]
  $region54: #{dueling_q_forward.1} parent=0
    _
  %s10 = ssub.s32 1, %s8
  %s11 = scalar_select 0, %s10, %s8
  $region1: #{dueling_q_forward.1} parent=0
    #allocation2 [shape = 'u8[4096]{0}', space=vmem, size = 0x1000, scoped, tag = 'input window, operand 0, single buffered']
    #allocation3 [shape = 's32[1]{0}', space=sflag, size = 0x4, scoped, tag = 'scoped memory for dueling_q_forward.1']
    #allocation4 [shape = 'u8[8192]{0}', space=vmem, size = 0x2000, scoped, tag = 'input window, operand 1, single buffered']
    #allocation5 [shape = 's32[1]{0}', space=sflag, size = 0x4, scoped, tag = 'scoped memory for dueling_q_forward.1']
    #allocation6 [shape = 'u8[65536]{0}', space=vmem, size = 0x10000, scoped, tag = 'input window, operand 3, single buffered']
    #allocation7 [shape = 'u8[65536]{0}', space=vmem, size = 0x10000, scoped, tag = 'input window, operand 5, single buffered']
    #allocation8 [shape = 's32[1]{0}', space=sflag, size = 0x4, scoped, tag = 'scoped memory for dueling_q_forward.1']
    %12 = vsyncpa [#allocation3], 0
    %13 = vsyncpa [#allocation5], 0
    %14 = vsyncpa [#allocation8], 0
    // Predicated region
    $region2: #{dueling_q_forward.1} parent=1 // pred_check
      _
    $region3: #{dueling_q_forward.1} parent=1 // pred_check_branch
      %16 = sbr.rel (0) target = $region5
    $region4: #{dueling_q_forward.1} parent=1 // pred_region
      %s18 = ssub.s32 128, 128
      %19 = vsyncadd [#allocation3], %s18
      %s21 = sshll.u32 [#allocation2], 4
      %s22 = int_to_ptr.vmem [resolvable:$true] %s21
      %24 = dma.hbm_to_vmem [thread:$0]  %s0, 128, %s22, [#allocation3]
    $region5: #{dueling_q_forward.1} parent=1 // pred_fallthru
      _
    // Predicated region
    $region6: #{dueling_q_forward.1} parent=1 // pred_check
      _
    $region7: #{dueling_q_forward.1} parent=1 // pred_check_branch
      %26 = sbr.rel (0) target = $region9
    $region8: #{dueling_q_forward.1} parent=1 // pred_region
      %s28 = ssub.s32 256, 256
      %29 = vsyncadd [#allocation5], %s28
      %s30 = sshll.u32 [#allocation4], 4
      %s31 = int_to_ptr.vmem [resolvable:$true] %s30
      %36 = dma.hbm_to_vmem [thread:$0]  %s1, 256, %s31, [#allocation5], 128, 128, 8
    $region9: #{dueling_q_forward.1} parent=1 // pred_fallthru
      _
    // Predicated region
    $region10: #{dueling_q_forward.1} parent=1 // pred_check
      _
    $region11: #{dueling_q_forward.1} parent=1 // pred_check_branch
      %38 = sbr.rel (0) target = $region13
    $region12: #{dueling_q_forward.1} parent=1 // pred_region
      _
    $region13: #{dueling_q_forward.1} parent=1 // pred_fallthru
      _
    // Predicated region
    $region14: #{dueling_q_forward.1} parent=1 // pred_check
      _
    $region15: #{dueling_q_forward.1} parent=1 // pred_check_branch
      %40 = sbr.rel (0) target = $region17
    $region16: #{dueling_q_forward.1} parent=1 // pred_region
      %s42 = ssub.s32 2048, 2048
      %43 = vsyncadd [#allocation5], %s42
      %s44 = sshll.u32 [#allocation6], 4
      %s45 = int_to_ptr.vmem [resolvable:$true] %s44
      %50 = dma.hbm_to_vmem [thread:$0]  %s3, 2048, %s45, [#allocation5], 128, 128, 8
    $region17: #{dueling_q_forward.1} parent=1 // pred_fallthru
      _
    // Predicated region
    $region18: #{dueling_q_forward.1} parent=1 // pred_check
      _
    $region19: #{dueling_q_forward.1} parent=1 // pred_check_branch
      %52 = sbr.rel (0) target = $region21
    $region20: #{dueling_q_forward.1} parent=1 // pred_region
      _
    $region21: #{dueling_q_forward.1} parent=1 // pred_fallthru
      _
    // Predicated region
    $region22: #{dueling_q_forward.1} parent=1 // pred_check
      _
    $region23: #{dueling_q_forward.1} parent=1 // pred_check_branch
      %54 = sbr.rel (0) target = $region25
    $region24: #{dueling_q_forward.1} parent=1 // pred_region
      %s56 = ssub.s32 2048, 2048
      %57 = vsyncadd [#allocation8], %s56
      %s58 = sshll.u32 [#allocation7], 4
      %s59 = int_to_ptr.vmem [resolvable:$true] %s58
      %64 = dma.hbm_to_vmem [thread:$0]  %s5, 2048, %s59, [#allocation8], 128, 128, 8
    $region25: #{dueling_q_forward.1} parent=1 // pred_fallthru
      _
    // Predicated region
    $region26: #{dueling_q_forward.1} parent=1 // pred_check
      _
    $region27: #{dueling_q_forward.1} parent=1 // pred_check_branch
      %66 = sbr.rel (0) target = $region29
    $region28: #{dueling_q_forward.1} parent=1 // pred_region
      _
    $region29: #{dueling_q_forward.1} parent=1 // pred_fallthru
      _
    // Predicated region
    $region30: #{dueling_q_forward.1} parent=1 // pred_check
      _
    $region31: #{dueling_q_forward.1} parent=1 // pred_check_branch
      %68 = sbr.rel (0) target = $region33
    $region32: #{dueling_q_forward.1} parent=1 // pred_region
      %69 = dma.done [#allocation3], 128
    $region33: #{dueling_q_forward.1} parent=1 // pred_fallthru
      _
    // Predicated region
    $region34: #{dueling_q_forward.1} parent=1 // pred_check
      _
    $region35: #{dueling_q_forward.1} parent=1 // pred_check_branch
      %71 = sbr.rel (0) target = $region37
    $region36: #{dueling_q_forward.1} parent=1 // pred_region
      %72 = dma.done [#allocation5], 256
    $region37: #{dueling_q_forward.1} parent=1 // pred_fallthru
      _
    // Predicated region
    $region38: #{dueling_q_forward.1} parent=1 // pred_check
      _
    $region39: #{dueling_q_forward.1} parent=1 // pred_check_branch
      %74 = sbr.rel (0) target = $region41
    $region40: #{dueling_q_forward.1} parent=1 // pred_region
      %75 = dma.done [#allocation5], 2048
    $region41: #{dueling_q_forward.1} parent=1 // pred_fallthru
      _
    // Predicated region
    $region42: #{dueling_q_forward.1} parent=1 // pred_check
      _
    $region43: #{dueling_q_forward.1} parent=1 // pred_check_branch
      %77 = sbr.rel (0) target = $region45
    $region44: #{dueling_q_forward.1} parent=1 // pred_region
      %78 = dma.done [#allocation8], 2048
    $region45: #{dueling_q_forward.1} parent=1 // pred_fallthru
      _
    %v79 = vld [vmem:[#allocation2] sm:$0xff]
    %v80 = vld [vmem:[#allocation4] sm:$0xff]
    %v81 = vld [vmem:[#allocation4 + $0x8] sm:$0xff]
    %v82 = vld [vmem:[%s2] sm:$0x1]
    %v84 = vlaneseq
    %v85 = vshrl.u32 %v84, 7
    %v86 = vsub.s32 0, %v85
    %v87 = vrot.slane %v82, %v86
    %vm89 = vcmask 130048
    %v91 = vsel %vm89, %v79, 0
    %93 = vmatprep.subr.mxu0 0.0
    %94 = vmatpush1.msra.mxu0 %v80
    %95 = vmatprep.subr.mxu0 0.0
    %96 = vmatpush1.msra.mxu0 %v81
    %97 = vmatprep.subr.mxu0 0.0
    %98 = vmatpush1.msra.mxu0 0.0
    %99 = vmatprep.subr.mxu0 0.0
    %100 = vmatpush1.msra.mxu0 0.0
    %101 = vmatprep.subr.mxu0 0.0
    %102 = vmatpush1.msra.mxu0 0.0
    %103 = vmatprep.subr.mxu0 0.0
    %104 = vmatpush1.msra.mxu0 0.0
    %105 = vmatprep.subr.mxu0 0.0
    %106 = vmatpush1.msra.mxu0 0.0
    %107 = vmatprep.subr.mxu0 0.0
    %108 = vmatpush1.msra.mxu0 0.0
    %109 = vmatprep.subr.mxu0 0.0
    %110 = vmatpush1.msra.mxu0 0.0
    %111 = vmatprep.subr.mxu0 0.0
    %112 = vmatpush1.msra.mxu0 0.0
    %113 = vmatprep.subr.mxu0 0.0
    %114 = vmatpush1.msra.mxu0 0.0
    %115 = vmatprep.subr.mxu0 0.0
    %116 = vmatpush1.msra.mxu0 0.0
    %117 = vmatprep.subr.mxu0 0.0
    %118 = vmatpush1.msra.mxu0 0.0
    %119 = vmatprep.subr.mxu0 0.0
    %120 = vmatpush1.msra.mxu0 0.0
    %121 = vmatprep.subr.mxu0 0.0
    %122 = vmatpush1.msra.mxu0 0.0
    %123 = vmatprep.subr.mxu0 0.0
    %124 = vmatpush1.msra.mxu0 0.0
    %125 = vmatprep.subr.mxu0 0.0
    %126 = vmatpush1.msra.mxu0 0.0
    %127 = vmatprep.subr.mxu0 0.0
    %128 = vmatpush1.msra.mxu0 0.0
    %129 = vmatprep.subr.mxu0 0.0
    %130 = vmatpush1.msra.mxu0 0.0
    %131 = vmatprep.subr.mxu0 0.0
    %132 = vmatpush1.msra.mxu0 0.0
    %133 = vmatprep.subr.mxu0 0.0
    %134 = vmatpush1.msra.mxu0 0.0
    %135 = vmatprep.subr.mxu0 0.0
    %136 = vmatpush1.msra.mxu0 0.0
    %137 = vmatprep.subr.mxu0 0.0
    %138 = vmatpush1.msra.mxu0 0.0
    %139 = vmatprep.subr.mxu0 0.0
    %140 = vmatpush1.msra.mxu0 0.0
    %141 = vmatprep.subr.mxu0 0.0
    %142 = vmatpush1.msra.mxu0 0.0
    %143 = vmatprep.subr.mxu0 0.0
    %144 = vmatpush1.msra.mxu0 0.0
    %145 = vmatprep.subr.mxu0 0.0
    %146 = vmatpush1.msra.mxu0 0.0
    %147 = vmatprep.subr.mxu0 0.0
    %148 = vmatpush1.msra.mxu0 0.0
    %149 = vmatprep.subr.mxu0 0.0
    %150 = vmatpush1.msra.mxu0 0.0
    %151 = vmatprep.subr.mxu0 0.0
    %152 = vmatpush1.msra.mxu0 0.0
    %153 = vmatprep.subr.mxu0 0.0
    %154 = vmatpush1.msra.mxu0 0.0
    %155 = vmatprep.subr.mxu0 0.0
    %156 = vmatpush1.msra.mxu0 0.0
    %157 = vmatprep.mubr.f32.mxu0 0.0
    %158 = vmatmul.mubr.f32.gmra.mrb[0].mxu0 %v91
    %v159 = vpop.f32.mrb[0].mxu0
    %v160 = vadd.f32 %v87, %v159
    %v161 = vpop.f32.mrb[0].mxu0
    %162 = vdwg.mxu0
    %v163 = vmax.f32 %v160, 0.0
    %v164 = vld [vmem:[#allocation6] sm:$0xff]
    %v165 = vld [vmem:[#allocation6 + $0x8] sm:$0xff]
    %v166 = vld [vmem:[#allocation6 + $0x10] sm:$0xff]
    %v167 = vld [vmem:[#allocation6 + $0x18] sm:$0xff]
    %v168 = vld [vmem:[#allocation6 + $0x20] sm:$0xff]
    %v169 = vld [vmem:[#allocation6 + $0x28] sm:$0xff]
    %v170 = vld [vmem:[#allocation6 + $0x30] sm:$0xff]
    %v171 = vld [vmem:[#allocation6 + $0x38] sm:$0xff]
    %v172 = vld [vmem:[#allocation6 + $0x40] sm:$0xff]
    %v173 = vld [vmem:[#allocation6 + $0x48] sm:$0xff]
    %v174 = vld [vmem:[#allocation6 + $0x50] sm:$0xff]
    %v175 = vld [vmem:[#allocation6 + $0x58] sm:$0xff]
    %v176 = vld [vmem:[#allocation6 + $0x60] sm:$0xff]
    %v177 = vld [vmem:[#allocation6 + $0x68] sm:$0xff]
    %v178 = vld [vmem:[#allocation6 + $0x70] sm:$0xff]
    %v179 = vld [vmem:[#allocation6 + $0x78] sm:$0xff]
    %v180 = vld [vmem:[%s4] sm:$0x1]
    %v182 = vlaneseq
    %v183 = vshrl.u32 %v182, 7
    %v184 = vsub.s32 0, %v183
    %v185 = vrot.slane %v180, %v184
    %187 = vmatprep.subr.mxu0 0.0
    %188 = vmatpush1.msra.mxu0 %v164
    %189 = vmatprep.subr.mxu0 0.0
    %190 = vmatpush1.msra.mxu0 %v165
    %191 = vmatprep.subr.mxu0 0.0
    %192 = vmatpush1.msra.mxu0 %v166
    %193 = vmatprep.subr.mxu0 0.0
    %194 = vmatpush1.msra.mxu0 %v167
    %195 = vmatprep.subr.mxu0 0.0
    %196 = vmatpush1.msra.mxu0 %v168
    %197 = vmatprep.subr.mxu0 0.0
    %198 = vmatpush1.msra.mxu0 %v169
    %199 = vmatprep.subr.mxu0 0.0
    %200 = vmatpush1.msra.mxu0 %v170
    %201 = vmatprep.subr.mxu0 0.0
    %202 = vmatpush1.msra.mxu0 %v171
    %203 = vmatprep.subr.mxu0 0.0
    %204 = vmatpush1.msra.mxu0 %v172
    %205 = vmatprep.subr.mxu0 0.0
    %206 = vmatpush1.msra.mxu0 %v173
    %207 = vmatprep.subr.mxu0 0.0
    %208 = vmatpush1.msra.mxu0 %v174
    %209 = vmatprep.subr.mxu0 0.0
    %210 = vmatpush1.msra.mxu0 %v175
    %211 = vmatprep.subr.mxu0 0.0
    %212 = vmatpush1.msra.mxu0 %v176
    %213 = vmatprep.subr.mxu0 0.0
    %214 = vmatpush1.msra.mxu0 %v177
    %215 = vmatprep.subr.mxu0 0.0
    %216 = vmatpush1.msra.mxu0 %v178
    %217 = vmatprep.subr.mxu0 0.0
    %218 = vmatpush1.msra.mxu0 %v179
    %219 = vmatprep.subr.mxu0 0.0
    %220 = vmatpush1.msra.mxu0 0.0
    %221 = vmatprep.subr.mxu0 0.0
    %222 = vmatpush1.msra.mxu0 0.0
    %223 = vmatprep.subr.mxu0 0.0
    %224 = vmatpush1.msra.mxu0 0.0
    %225 = vmatprep.subr.mxu0 0.0
    %226 = vmatpush1.msra.mxu0 0.0
    %227 = vmatprep.subr.mxu0 0.0
    %228 = vmatpush1.msra.mxu0 0.0
    %229 = vmatprep.subr.mxu0 0.0
    %230 = vmatpush1.msra.mxu0 0.0
    %231 = vmatprep.subr.mxu0 0.0
    %232 = vmatpush1.msra.mxu0 0.0
    %233 = vmatprep.subr.mxu0 0.0
    %234 = vmatpush1.msra.mxu0 0.0
    %235 = vmatprep.subr.mxu0 0.0
    %236 = vmatpush1.msra.mxu0 0.0
    %237 = vmatprep.subr.mxu0 0.0
    %238 = vmatpush1.msra.mxu0 0.0
    %239 = vmatprep.subr.mxu0 0.0
    %240 = vmatpush1.msra.mxu0 0.0
    %241 = vmatprep.subr.mxu0 0.0
    %242 = vmatpush1.msra.mxu0 0.0
    %243 = vmatprep.subr.mxu0 0.0
    %244 = vmatpush1.msra.mxu0 0.0
    %245 = vmatprep.subr.mxu0 0.0
    %246 = vmatpush1.msra.mxu0 0.0
    %247 = vmatprep.subr.mxu0 0.0
    %248 = vmatpush1.msra.mxu0 0.0
    %249 = vmatprep.subr.mxu0 0.0
    %250 = vmatpush1.msra.mxu0 0.0
    %251 = vmatprep.mubr.f32.mxu0 0.0
    %252 = vmatmul.mubr.f32.gmra.mrb[0].mxu0 %v163
    %v253 = vpop.f32.mrb[0].mxu0
    %v254 = vadd.f32 %v185, %v253
    %v255 = vpop.f32.mrb[0].mxu0
    %256 = vdwg.mxu0
    %v257 = vmax.f32 %v254, 0.0
    %v258 = vld [vmem:[#allocation7] sm:$0xff]
    %v259 = vld [vmem:[#allocation7 + $0x8] sm:$0xff]
    %v260 = vld [vmem:[#allocation7 + $0x10] sm:$0xff]
    %v261 = vld [vmem:[#allocation7 + $0x18] sm:$0xff]
    %v262 = vld [vmem:[#allocation7 + $0x20] sm:$0xff]
    %v263 = vld [vmem:[#allocation7 + $0x28] sm:$0xff]
    %v264 = vld [vmem:[#allocation7 + $0x30] sm:$0xff]
    %v265 = vld [vmem:[#allocation7 + $0x38] sm:$0xff]
    %v266 = vld [vmem:[#allocation7 + $0x40] sm:$0xff]
    %v267 = vld [vmem:[#allocation7 + $0x48] sm:$0xff]
    %v268 = vld [vmem:[#allocation7 + $0x50] sm:$0xff]
    %v269 = vld [vmem:[#allocation7 + $0x58] sm:$0xff]
    %v270 = vld [vmem:[#allocation7 + $0x60] sm:$0xff]
    %v271 = vld [vmem:[#allocation7 + $0x68] sm:$0xff]
    %v272 = vld [vmem:[#allocation7 + $0x70] sm:$0xff]
    %v273 = vld [vmem:[#allocation7 + $0x78] sm:$0xff]
    %v274 = vld [vmem:[%s6] sm:$0x1]
    %v276 = vlaneseq
    %v277 = vshrl.u32 %v276, 7
    %v278 = vsub.s32 0, %v277
    %v279 = vrot.slane %v274, %v278
    %281 = vmatprep.subr.mxu0 0.0
    %282 = vmatpush1.msra.mxu0 %v258
    %283 = vmatprep.subr.mxu0 0.0
    %284 = vmatpush1.msra.mxu0 %v259
    %285 = vmatprep.subr.mxu0 0.0
    %286 = vmatpush1.msra.mxu0 %v260
    %287 = vmatprep.subr.mxu0 0.0
    %288 = vmatpush1.msra.mxu0 %v261
    %289 = vmatprep.subr.mxu0 0.0
    %290 = vmatpush1.msra.mxu0 %v262
    %291 = vmatprep.subr.mxu0 0.0
    %292 = vmatpush1.msra.mxu0 %v263
    %293 = vmatprep.subr.mxu0 0.0
    %294 = vmatpush1.msra.mxu0 %v264
    %295 = vmatprep.subr.mxu0 0.0
    %296 = vmatpush1.msra.mxu0 %v265
    %297 = vmatprep.subr.mxu0 0.0
    %298 = vmatpush1.msra.mxu0 %v266
    %299 = vmatprep.subr.mxu0 0.0
    %300 = vmatpush1.msra.mxu0 %v267
    %301 = vmatprep.subr.mxu0 0.0
    %302 = vmatpush1.msra.mxu0 %v268
    %303 = vmatprep.subr.mxu0 0.0
    %304 = vmatpush1.msra.mxu0 %v269
    %305 = vmatprep.subr.mxu0 0.0
    %306 = vmatpush1.msra.mxu0 %v270
    %307 = vmatprep.subr.mxu0 0.0
    %308 = vmatpush1.msra.mxu0 %v271
    %309 = vmatprep.subr.mxu0 0.0
    %310 = vmatpush1.msra.mxu0 %v272
    %311 = vmatprep.subr.mxu0 0.0
    %312 = vmatpush1.msra.mxu0 %v273
    %313 = vmatprep.subr.mxu0 0.0
    %314 = vmatpush1.msra.mxu0 0.0
    %315 = vmatprep.subr.mxu0 0.0
    %316 = vmatpush1.msra.mxu0 0.0
    %317 = vmatprep.subr.mxu0 0.0
    %318 = vmatpush1.msra.mxu0 0.0
    %319 = vmatprep.subr.mxu0 0.0
    %320 = vmatpush1.msra.mxu0 0.0
    %321 = vmatprep.subr.mxu0 0.0
    %322 = vmatpush1.msra.mxu0 0.0
    %323 = vmatprep.subr.mxu0 0.0
    %324 = vmatpush1.msra.mxu0 0.0
    %325 = vmatprep.subr.mxu0 0.0
    %326 = vmatpush1.msra.mxu0 0.0
    %327 = vmatprep.subr.mxu0 0.0
    %328 = vmatpush1.msra.mxu0 0.0
    %329 = vmatprep.subr.mxu0 0.0
    %330 = vmatpush1.msra.mxu0 0.0
    %331 = vmatprep.subr.mxu0 0.0
    %332 = vmatpush1.msra.mxu0 0.0
    %333 = vmatprep.subr.mxu0 0.0
    %334 = vmatpush1.msra.mxu0 0.0
    %335 = vmatprep.subr.mxu0 0.0
    %336 = vmatpush1.msra.mxu0 0.0
    %337 = vmatprep.subr.mxu0 0.0
    %338 = vmatpush1.msra.mxu0 0.0
    %339 = vmatprep.subr.mxu0 0.0
    %340 = vmatpush1.msra.mxu0 0.0
    %341 = vmatprep.subr.mxu0 0.0
    %342 = vmatpush1.msra.mxu0 0.0
    %343 = vmatprep.subr.mxu0 0.0
    %344 = vmatpush1.msra.mxu0 0.0
    %345 = vmatprep.mubr.f32.mxu0 0.0
    %346 = vmatmul.mubr.f32.gmra.mrb[0].mxu0 %v257
    %v347 = vpop.f32.mrb[0].mxu0
    %v348 = vadd.f32 %v279, %v347
    %v349 = vpop.f32.mrb[0].mxu0
    %350 = vdwg.mxu0
    %351 = vmax.xlane.f32.xlu0 %v348
    %v352 = vpop.xlane.xlu0 %351
    %v353 = vsub.f32 %v348, %v352
    %v354 = vmul.f32 %v353, 1.442695
    %v355 = vpow.pop %v354
    %356 = vadd.xlane.f32.xlu0 %v355
    %v357 = vpop.xlane.xlu0 %356
    %v358 = vrcp.pop %v357
    %v359 = vmul.f32 %v355, %v358
    %360 = vst [vmem:[%s7] sm:$0xff] %v359
    // Predicated region
    $region46: #{dueling_q_forward.1} parent=1 // pred_check
      _
    $region47: #{dueling_q_forward.1} parent=1 // pred_check_branch
      %362 = sbr.rel (0) target = $region49
    $region48: #{dueling_q_forward.1} parent=1 // pred_region
      _
    $region49: #{dueling_q_forward.1} parent=1 // pred_fallthru
      _
    // Predicated region
    $region50: #{dueling_q_forward.1} parent=1 // pred_check
      _
    $region51: #{dueling_q_forward.1} parent=1 // pred_check_branch
      %364 = sbr.rel (0) target = $region53
    $region52: #{dueling_q_forward.1} parent=1 // pred_region
      _
    $region53: #{dueling_q_forward.1} parent=1 // pred_fallthru
      _
    %365 = vsyncpa [#allocation3], 1
    %366 = vsyncpa [#allocation5], 1
    %367 = vsyncpa [#allocation8], 1

</llo_original>
